<compile_context>
chip_gen: v7x
topology: tpu7x:2x2x1
jax: 0.10.0
libtpu: 0.0.40
codegen_flags: <defaults>
</compile_context>

<pallas_src>
import jax
import jax.numpy as jnp
import numpy as np
from jax.experimental import pallas as pl
from jax.experimental.pallas import tpu as pltpu

EPS = 1e-5
BLOCK_BUDGET = 8 * 1024 * 1024        # target bytes per (TN, C, TW) block
VMEM_CAP = 48 * 1024 * 1024           # safe on v7x (64 MiB) and v5e/v6e


# ----------------------------- Pallas kernels -----------------------------

def _bn_stats_kernel(x_ref, sum_ref, sq_ref):
    """Per-batch-tile partial sum / sum-of-squares, accumulated over HW tiles."""
    @pl.when(pl.program_id(1) == 0)
    def _():
        sum_ref[...] = jnp.zeros_like(sum_ref)
        sq_ref[...] = jnp.zeros_like(sq_ref)

    x = x_ref[...].astype(jnp.float32)                   # (TN, C, TW)
    s = jnp.sum(x, axis=2, keepdims=True)                # (TN, C, 1)
    q = jnp.sum(x * x, axis=2, keepdims=True)            # (TN, C, 1)
    sum_ref[...] += jnp.sum(s, axis=0)                   # (C, 1)
    sq_ref[...] += jnp.sum(q, axis=0)                    # (C, 1)


def _bn_act_kernel(x_ref, scale_ref, shift_ref, slope_ref, o_ref):
    """y = x * scale + shift, then slope-parameterized ReLU (ReLU/Leaky/PReLU)."""
    x = x_ref[...].astype(jnp.float32)                   # (TN, C, TW)
    scale = scale_ref[...][None, :, :]                   # (1, C, 1)
    shift = shift_ref[...][None, :, :]                   # (1, C, 1)
    y = x * scale + shift
    slope = slope_ref[0]                                 # SMEM scalar
    y = jnp.where(y >= 0.0, y, y * slope)
    o_ref[...] = y.astype(o_ref.dtype)


# ----------------------------- tiling helpers -----------------------------

def _largest_divisor_le(n, cap):
    cap = max(1, min(n, int(cap)))
    for d in range(cap, 0, -1):
        if n % d == 0:
            return d
    return 1


def _pick_tiles(N, C, HW, itemsize, *, budget=BLOCK_BUDGET):
    """Pick (TN, TW) so a (TN, C, TW) block is ~budget bytes and tiles evenly."""
    row_bytes = C * HW * itemsize
    if row_bytes <= budget:
        # Keep full HW (contiguous DMA per block); grow the batch tile.
        tn_target = max(1, budget // row_bytes)
        if N >= 2:
            # Keep >= 2 batch tiles so pass 1 can megacore-shard on v7x.
            tn_target = min(tn_target, N // 2)
        return _largest_divisor_le(N, tn_target), HW
    # Full-HW row exceeds the budget: TN = 1 and tile the lane (HW) axis.
    if HW % 128 == 0:
        max_tw = max(128, (budget // (C * itemsize)) // 128 * 128)
        tw = min(max_tw, HW)
        while HW % tw != 0:
            tw -= 128
        return 1, tw
    # Odd HW larger than the budget: single full-HW block (see TODO above).
    return 1, HW


# ----------------------------- wrappers -----------------------------

def bn_lrelu_forward(x_nchw, gamma, beta, slope, *, eps=EPS):
    """BatchNorm2d (training-mode batch stats) + activation via negative slope.

    x_nchw: (N, C, H, W).  slope: scalar (0.0 => ReLU, 0.1 => LeakyReLU,
    learned alpha => PReLU).  Returns (N, C, H, W) in x's dtype.
    """
    N, C, H, W = x_nchw.shape
    HW = H * W
    M = N * HW
    itemsize = jnp.dtype(x_nchw.dtype).itemsize

    TN, TW = _pick_tiles(N, C, HW, itemsize)
    GN, GT = N // TN, HW // TW
    block_bytes = TN * C * TW * itemsize
    # Input + output, double-buffered, plus headroom; capped for v7x's 64 MiB.
    vmem_limit = int(min(VMEM_CAP, max(16 * 1024 * 1024,
                                       4 * block_bytes + (1 << 20))))

    x3 = x_nchw.reshape(N, C, HW)                        # lane axis = HW
    slope1 = jnp.asarray(slope, jnp.float32).reshape(1)

    # ---- pass 1: per-batch-tile partial sums (parallel over batch tiles) ----
    sums, sqs = pl.pallas_call(
        _bn_stats_kernel,
        out_shape=(jax.ShapeDtypeStruct((GN, C, 1), jnp.float32),
                   jax.ShapeDtypeStruct((GN, C, 1), jnp.float32)),
        grid=(GN, GT),
        in_specs=[pl.BlockSpec((TN, C, TW), lambda n, t: (n, 0, t))],
        out_specs=[pl.BlockSpec((None, C, 1), lambda n, t: (n, 0, 0)),
                   pl.BlockSpec((None, C, 1), lambda n, t: (n, 0, 0))],
        compiler_params=pltpu.CompilerParams(
            dimension_semantics=("parallel", "arbitrary"),
            vmem_limit_bytes=vmem_limit),
        cost_estimate=pl.CostEstimate(
            flops=3 * M * C, transcendentals=0,
            bytes_accessed=M * C * itemsize),
    )(x3)

    # ---- tiny C-element fold: batch stats -> per-channel scale / shift ----
    inv_m = jnp.float32(1.0 / M)
    total_sum = jnp.sum(sums, axis=0)                    # (C, 1)
    total_sq = jnp.sum(sqs, axis=0)                      # (C, 1)
    mean = total_sum * inv_m
    var = jnp.maximum(total_sq * inv_m - mean * mean, 0.0)   # clamp cancellation
    scale = gamma.reshape(C, 1).astype(jnp.float32) * jax.lax.rsqrt(var + eps)
    shift = beta.reshape(C, 1).astype(jnp.float32) - mean * scale

    # ---- pass 2: fused scale/shift + activation (fully parallel) ----
    out = pl.pallas_call(
        _bn_act_kernel,
        out_shape=jax.ShapeDtypeStruct((N, C, HW), x_nchw.dtype),
        grid=(GN, GT),
        in_specs=[
            pl.BlockSpec((TN, C, TW), lambda n, t: (n, 0, t)),  # x tile
            pl.BlockSpec((C, 1), lambda n, t: (0, 0)),          # scale
            pl.BlockSpec((C, 1), lambda n, t: (0, 0)),          # shift
            pl.BlockSpec(memory_space=pltpu.MemorySpace.SMEM),  # slope
        ],
        out_specs=pl.BlockSpec((TN, C, TW), lambda n, t: (n, 0, t)),
        compiler_params=pltpu.CompilerParams(
            dimension_semantics=("parallel", "parallel"),
            vmem_limit_bytes=vmem_limit),
        cost_estimate=pl.CostEstimate(
            flops=4 * M * C, transcendentals=0,
            bytes_accessed=2 * M * C * itemsize),
    )(x3, scale, shift, slope1)

    return out.reshape(N, C, H, W)


def bn_lrelu(x, gamma, beta, *, activation="PRelu", prelu_alpha=0.25, eps=EPS):
    """Mirror of the PyTorch bn_lrelu module forward."""
    if activation == "Relu":
        slope = jnp.float32(0.0)
    elif activation == "Leaky_Relu":
        slope = jnp.float32(0.1)
    elif activation == "PRelu":
        slope = jnp.asarray(prelu_alpha, jnp.float32)
    else:
        raise ValueError(f"unknown activation: {activation}")
    return bn_lrelu_forward(x, gamma, beta, slope, eps=eps)


# ----------------------------- reference -----------------------------

def _reference(x, gamma, beta, slope, eps=EPS):
    mean = jnp.mean(x, axis=(0, 2, 3), keepdims=True)
    var = jnp.mean(jnp.square(x - mean), axis=(0, 2, 3), keepdims=True)
    y = (x - mean) * jax.lax.rsqrt(var + eps)
    y = y * gamma.reshape(1, -1, 1, 1) + beta.reshape(1, -1, 1, 1)
    return jnp.where(y >= 0.0, y, slope * y)


# ----------------------------- main -----------------------------

if __name__ == "__main__":
    key = jax.random.PRNGKey(0)
    kx, kg, kb = jax.random.split(key, 3)

    N, C, H, W = 2, 4, 16, 16                       # small NCHW test shape
    x = jax.random.normal(kx, (N, C, H, W), jnp.float32)
    gamma = 1.0 + 0.1 * jax.random.normal(kg, (C,), jnp.float32)
    beta = 0.1 * jax.random.normal(kb, (C,), jnp.float32)

    fwd = jax.jit(bn_lrelu_forward)

    # PReLU (default alpha 0.25), ReLU, LeakyReLU(0.1) all share one kernel.
    for name, slope in (("PRelu", 0.25), ("Relu", 0.0), ("Leaky_Relu", 0.1)):
        out = jax.block_until_ready(fwd(x, gamma, beta, jnp.float32(slope)))
        assert out.shape == x.shape and out.dtype == x.dtype
        ref = _reference(x, gamma, beta, slope)
        err = float(jnp.max(jnp.abs(out - ref)))
        assert np.isfinite(err) and err < 1e-3, f"{name}: max abs err {err}"

    print("KERNEL_OK")
</pallas_src>

<mosaic_0001>
module attributes {stable_mosaic.version = 11 : i64} {
  func.func @_bn_stats_kernel(%arg0: i32, %arg1: i32, %arg2: memref<1x4x256xf32, #tpu.memory_space<vmem>>, %arg3: memref<1x4x1xf32, #tpu.memory_space<vmem>>, %arg4: memref<1x4x1xf32, #tpu.memory_space<vmem>>) attributes {dimension_semantics = [#tpu.dimension_semantics<parallel>, #tpu.dimension_semantics<arbitrary>], iteration_bounds = array<i64: 2, 1>, scalar_prefetch = 0 : i64, scratch_operands = 0 : i64, tpu.core_type = #tpu.core_type<tc>, window_params = [{transform_indices = @transform_0, window_bounds = array<i64: 1, 4, 256>}, {transform_indices = @transform_1, window_bounds = array<i64: 1, 4, 1>}, {transform_indices = @transform_2, window_bounds = array<i64: 1, 4, 1>}]} {
    %c0_i32 = arith.constant 0 : i32
    %0 = arith.cmpi eq, %arg1, %c0_i32 : i32
    %1 = arith.extui %0 : i1 to i32
    %c0_i32_0 = arith.constant 0 : i32
    %2 = arith.cmpi ne, %1, %c0_i32_0 : i32
    scf.if %2 {
      %cst_18 = arith.constant 0.000000e+00 : f32
      %23 = vector.broadcast %cst_18 : f32 to vector<4x1xf32>
      %c0_19 = arith.constant 0 : index
      %c0_20 = arith.constant 0 : index
      %c0_21 = arith.constant 0 : index
      %24 = vector.load %arg3[%c0_19, %c0_20, %c0_21] : memref<1x4x1xf32, #tpu.memory_space<vmem>>, vector<1x4x1xf32>
      %25 = vector.shape_cast %24 : vector<1x4x1xf32> to vector<4x1xf32>
      %26 = vector.shape_cast %23 : vector<4x1xf32> to vector<1x4x1xf32>
      tpu.vector_store %arg3[%c0_19, %c0_20, %c0_21], %26 {strides = array<i32>} : memref<1x4x1xf32, #tpu.memory_space<vmem>>, vector<1x4x1xf32>,
      %cst_22 = arith.constant 0.000000e+00 : f32
      %27 = vector.broadcast %cst_22 : f32 to vector<4x1xf32>
      %c0_23 = arith.constant 0 : index
      %c0_24 = arith.constant 0 : index
      %c0_25 = arith.constant 0 : index
      %28 = vector.load %arg4[%c0_23, %c0_24, %c0_25] : memref<1x4x1xf32, #tpu.memory_space<vmem>>, vector<1x4x1xf32>
      %29 = vector.shape_cast %28 : vector<1x4x1xf32> to vector<4x1xf32>
      %30 = vector.shape_cast %27 : vector<4x1xf32> to vector<1x4x1xf32>
      tpu.vector_store %arg4[%c0_23, %c0_24, %c0_25], %30 {strides = array<i32>} : memref<1x4x1xf32, #tpu.memory_space<vmem>>, vector<1x4x1xf32>,
    } else {
    }
    %c0 = arith.constant 0 : index
    %c0_1 = arith.constant 0 : index
    %c0_2 = arith.constant 0 : index
    %3 = vector.load %arg2[%c0, %c0_1, %c0_2] : memref<1x4x256xf32, #tpu.memory_space<vmem>>, vector<1x4x256xf32>
    %cst = arith.constant dense<0.000000e+00> : vector<1x4xf32>
    %4 = vector.multi_reduction <add>, %3, %cst [2] : vector<1x4x256xf32> to vector<1x4xf32>
    %5 = vector.shape_cast %4 : vector<1x4xf32> to vector<1x4x1xf32>
    %6 = arith.mulf %3, %3 : vector<1x4x256xf32>
    %cst_3 = arith.constant dense<0.000000e+00> : vector<1x4xf32>
    %7 = vector.multi_reduction <add>, %6, %cst_3 [2] : vector<1x4x256xf32> to vector<1x4xf32>
    %8 = vector.shape_cast %7 : vector<1x4xf32> to vector<1x4x1xf32>
    %c0_4 = arith.constant 0 : index
    %c0_5 = arith.constant 0 : index
    %c0_6 = arith.constant 0 : index
    %9 = vector.load %arg3[%c0_4, %c0_5, %c0_6] : memref<1x4x1xf32, #tpu.memory_space<vmem>>, vector<1x4x1xf32>
    %10 = vector.shape_cast %9 : vector<1x4x1xf32> to vector<4x1xf32>
    %cst_7 = arith.constant dense<0.000000e+00> : vector<4x1xf32>
    %11 = vector.multi_reduction <add>, %5, %cst_7 [0] : vector<1x4x1xf32> to vector<4x1xf32>
    %12 = arith.addf %10, %11 : vector<4x1xf32>
    %c0_8 = arith.constant 0 : index
    %c0_9 = arith.constant 0 : index
    %c0_10 = arith.constant 0 : index
    %13 = vector.load %arg3[%c0_8, %c0_9, %c0_10] : memref<1x4x1xf32, #tpu.memory_space<vmem>>, vector<1x4x1xf32>
    %14 = vector.shape_cast %13 : vector<1x4x1xf32> to vector<4x1xf32>
    %15 = vector.shape_cast %12 : vector<4x1xf32> to vector<1x4x1xf32>
    tpu.vector_store %arg3[%c0_8, %c0_9, %c0_10], %15 {strides = array<i32>} : memref<1x4x1xf32, #tpu.memory_space<vmem>>, vector<1x4x1xf32>,
    %c0_11 = arith.constant 0 : index
    %c0_12 = arith.constant 0 : index
    %c0_13 = arith.constant 0 : index
    %16 = vector.load %arg4[%c0_11, %c0_12, %c0_13] : memref<1x4x1xf32, #tpu.memory_space<vmem>>, vector<1x4x1xf32>
    %17 = vector.shape_cast %16 : vector<1x4x1xf32> to vector<4x1xf32>
    %cst_14 = arith.constant dense<0.000000e+00> : vector<4x1xf32>
    %18 = vector.multi_reduction <add>, %8, %cst_14 [0] : vector<1x4x1xf32> to vector<4x1xf32>
    %19 = arith.addf %17, %18 : vector<4x1xf32>
    %c0_15 = arith.constant 0 : index
    %c0_16 = arith.constant 0 : index
    %c0_17 = arith.constant 0 : index
    %20 = vector.load %arg4[%c0_15, %c0_16, %c0_17] : memref<1x4x1xf32, #tpu.memory_space<vmem>>, vector<1x4x1xf32>
    %21 = vector.shape_cast %20 : vector<1x4x1xf32> to vector<4x1xf32>
    %22 = vector.shape_cast %19 : vector<4x1xf32> to vector<1x4x1xf32>
    tpu.vector_store %arg4[%c0_15, %c0_16, %c0_17], %22 {strides = array<i32>} : memref<1x4x1xf32, #tpu.memory_space<vmem>>, vector<1x4x1xf32>,
    return
  }
  func.func @transform_0(%arg0: i32, %arg1: i32) -> (i32, i32, i32) {
    %c0_i32 = arith.constant 0 : i32
    %c0_i32_0 = arith.constant 0 : i32
    return %arg0, %c0_i32, %arg1 : i32, i32, i32
  }
  func.func @transform_1(%arg0: i32, %arg1: i32) -> (i32, i32, i32) {
    %c0_i32 = arith.constant 0 : i32
    %c0_i32_0 = arith.constant 0 : i32
    %c0_i32_1 = arith.constant 0 : i32
    return %arg0, %c0_i32, %c0_i32_0 : i32, i32, i32
  }
  func.func @transform_2(%arg0: i32, %arg1: i32) -> (i32, i32, i32) {
    %c0_i32 = arith.constant 0 : i32
    %c0_i32_0 = arith.constant 0 : i32
    %c0_i32_1 = arith.constant 0 : i32
    return %arg0, %c0_i32, %c0_i32_0 : i32, i32, i32
  }
}

module attributes {stable_mosaic.version = 11 : i64} {
  func.func @_bn_act_kernel(%arg0: i32, %arg1: i32, %arg2: memref<1x4x256xf32, #tpu.memory_space<vmem>>, %arg3: memref<4x1xf32, #tpu.memory_space<vmem>>, %arg4: memref<4x1xf32, #tpu.memory_space<vmem>>, %arg5: memref<1xf32, #tpu.memory_space<smem>>, %arg6: memref<1x4x256xf32, #tpu.memory_space<vmem>>) attributes {dimension_semantics = [#tpu.dimension_semantics<parallel>, #tpu.dimension_semantics<parallel>], iteration_bounds = array<i64: 2, 1>, scalar_prefetch = 0 : i64, scratch_operands = 0 : i64, tpu.core_type = #tpu.core_type<tc>, window_params = [{transform_indices = @transform_0, window_bounds = array<i64: 1, 4, 256>}, {pipeline_mode = #tpu.pipeline_mode<synchronous>, transform_indices = @transform_1, window_bounds = array<i64: 4, 1>}, {pipeline_mode = #tpu.pipeline_mode<synchronous>, transform_indices = @transform_2, window_bounds = array<i64: 4, 1>}, {transform_indices = @transform_3, window_bounds = array<i64: 1>}, {transform_indices = @transform_4, window_bounds = array<i64: 1, 4, 256>}]} {
    %c0 = arith.constant 0 : index
    %c0_0 = arith.constant 0 : index
    %c0_1 = arith.constant 0 : index
    %0 = vector.load %arg2[%c0, %c0_0, %c0_1] : memref<1x4x256xf32, #tpu.memory_space<vmem>>, vector<1x4x256xf32>
    %c0_2 = arith.constant 0 : index
    %c0_3 = arith.constant 0 : index
    %1 = vector.load %arg3[%c0_2, %c0_3] : memref<4x1xf32, #tpu.memory_space<vmem>>, vector<4x1xf32>
    %2 = vector.shape_cast %1 : vector<4x1xf32> to vector<1x4x1xf32>
    %c0_4 = arith.constant 0 : index
    %c0_5 = arith.constant 0 : index
    %3 = vector.load %arg4[%c0_4, %c0_5] : memref<4x1xf32, #tpu.memory_space<vmem>>, vector<4x1xf32>
    %4 = vector.shape_cast %3 : vector<4x1xf32> to vector<1x4x1xf32>
    %5 = vector.broadcast %2 : vector<1x4x1xf32> to vector<1x4x256xf32>
    %6 = arith.mulf %0, %5 : vector<1x4x256xf32>
    %7 = vector.broadcast %4 : vector<1x4x1xf32> to vector<1x4x256xf32>
    %8 = arith.addf %6, %7 : vector<1x4x256xf32>
    %c0_6 = arith.constant 0 : index
    %9 = memref.load %arg5[%c0_6] : memref<1xf32, #tpu.memory_space<smem>>
    %cst = arith.constant 0.000000e+00 : f32
    %10 = vector.broadcast %cst : f32 to vector<1x4x256xf32>
    %11 = arith.cmpf oge, %8, %10 : vector<1x4x256xf32>
    %12 = vector.broadcast %9 : f32 to vector<1x4x256xf32>
    %13 = arith.mulf %8, %12 : vector<1x4x256xf32>
    %14 = arith.select %11, %8, %13 : vector<1x4x256xi1>, vector<1x4x256xf32>
    %c0_7 = arith.constant 0 : index
    %c0_8 = arith.constant 0 : index
    %c0_9 = arith.constant 0 : index
    %15 = vector.load %arg6[%c0_7, %c0_8, %c0_9] : memref<1x4x256xf32, #tpu.memory_space<vmem>>, vector<1x4x256xf32>
    tpu.vector_store %arg6[%c0_7, %c0_8, %c0_9], %14 {strides = array<i32>} : memref<1x4x256xf32, #tpu.memory_space<vmem>>, vector<1x4x256xf32>,
    return
  }
  func.func @transform_0(%arg0: i32, %arg1: i32) -> (i32, i32, i32) {
    %c0_i32 = arith.constant 0 : i32
    %c0_i32_0 = arith.constant 0 : i32
    return %arg0, %c0_i32, %arg1 : i32, i32, i32
  }
  func.func @transform_1(%arg0: i32, %arg1: i32) -> (i32, i32) {
    %c0_i32 = arith.constant 0 : i32
    %c0_i32_0 = arith.constant 0 : i32
    %c0_i32_1 = arith.constant 0 : i32
    return %c0_i32, %c0_i32_0 : i32, i32
  }
  func.func @transform_2(%arg0: i32, %arg1: i32) -> (i32, i32) {
    %c0_i32 = arith.constant 0 : i32
    %c0_i32_0 = arith.constant 0 : i32
    %c0_i32_1 = arith.constant 0 : i32
    return %c0_i32, %c0_i32_0 : i32, i32
  }
  func.func @transform_3(%arg0: i32, %arg1: i32) -> i32 {
    %c0_i32 = arith.constant 0 : i32
    %c0_i32_0 = arith.constant 0 : i32
    return %c0_i32 : i32
  }
  func.func @transform_4(%arg0: i32, %arg1: i32) -> (i32, i32, i32) {
    %c0_i32 = arith.constant 0 : i32
    %c0_i32_0 = arith.constant 0 : i32
    return %arg0, %c0_i32, %arg1 : i32, i32, i32
  }
}

</mosaic_0001>

<llo_original>
// kernel: bn_lrelu_forward.2
$region0: #{bn_lrelu_forward.2}
  #allocation0 [shape = 'u32[]', space=smem, size = 0x4, offset = 0x4, fixed_abs, tag = 'smem constant byte address 0x4 - core index']
  #allocation1 [shape = 'u32[144,128]{1,0:T(1,128)}', space=vmem, size = 0x12000, scoped, tag = 'internal scratch']
  %s0 = inlined_call_operand.vmem [shape: f32[2,4,256], index: 0, kind: input, shape index: {}]
  %s1 = inlined_call_operand.vmem [shape: f32[2,4,1], index: 1, kind: output, shape index: {0}]
  %s2 = inlined_call_operand.vmem [shape: f32[2,4,1], index: 2, kind: output, shape index: {1}]
  %3 = xla_tuple %s1, %s2
  %s4 = sld [smem:[#allocation0]]
  $region49: #{bn_lrelu_forward.2} parent=0
    _
  %s6 = ssub.s32 1, %s4
  %s7 = scalar_select 0, %s6, %s4
  loop: start=0, step=1, limit=4
  $region2: #{bn_lrelu_forward.2} parent=0 // loop_pre_header
    _
  $region3: #{bn_lrelu_forward.2} parent=0 // loop_header
    %s9 = sphi 0, %s13
    %p10 = scmp.ge.s32.totalorder %s9, 4
    %s16 = sphi 0, %s28
    %s17 = sphi 0, %s24
    %s18 = sphi 0, %s16
    %s19 = sphi 0, %s17
    %s20 = sphi 0, %s18
    %s21 = sphi 0, %s19
    %s33 = sphi 0, %s35
    %s36 = sphi 0, %s33
    %s37 = sphi 0, %s36
    %s53 = sphi 0, %s37
    %s59 = sphi 0, %s61
    %s62 = sphi 0, %s59
    %s63 = sphi 0, %s62
    %s79 = sphi 0, %s63
    %s85 = sphi 0, %s87
    %s88 = sphi 0, %s85
    %s89 = sphi 0, %s88
    %s105 = sphi 0, %s89
  $region4: #{bn_lrelu_forward.2} parent=0 // loop_header_branch
    %12 = sbr.rel (%p10) target = $region8
  $region5: #{bn_lrelu_forward.2} parent=0 // loop_body
    %s14 = ssub.s32 %s9, 1
    %s15 = ssub.s32 %s9, 2
    %s22 = sadd.s32 1, %s17
    %p23 = scmp.ge.s32.totalorder %s22, 1
    %s24 = scalar_select %p23, 0, %s22
    %s25 = sadd.s32 1, %s16
    %s26 = scalar_select %p23, %s25, %s16
    %p27 = scmp.ge.s32.totalorder %s26, 2
    %s28 = scalar_select %p27, 0, %s26
    %s29 = ssub.s32 %s16, %s28
    %s30 = ssub.s32 %s17, %s24
    %s31 = sor.u32 %s29, %s30
    %p32 = scmp.eq.s32.totalorder %s31, 0
    %s34 = sadd.s32 %s33, 1
    %s35 = scalar_select %p32, %s33, %s34
    %p38 = pneg %p32
    %p39 = scmp.eq.s32.totalorder %s9, 1
    %p40 = por %p38, %p39
    %p41 = scmp.ne.s32.totalorder %s33, %s36
    %p42 = scmp.eq.s32.totalorder %s9, 0
    %p43 = por %p41, %p42
    %p44 = scmp.ne.s32.totalorder %s33, %s36
    %p45 = scmp.eq.s32.totalorder %s14, 1
    %p46 = por %p44, %p45
    %p47 = scmp.ne.s32.totalorder %s36, %s37
    %p48 = scmp.eq.s32.totalorder %s14, 0
    %p49 = por %p47, %p48
    %p50 = scmp.ne.s32.totalorder %s36, %s37
    %p51 = scmp.eq.s32.totalorder %s15, 1
    %p52 = por %p50, %p51
    %p54 = scmp.ne.s32.totalorder %s37, %s53
    %p55 = scmp.eq.s32.totalorder %s15, 0
    %p56 = por %p54, %p55
    %s57 = ssub.s32 %s16, %s28
    %p58 = scmp.eq.s32.totalorder %s57, 0
    %s60 = sadd.s32 %s59, 1
    %s61 = scalar_select %p58, %s59, %s60
    %p64 = pneg %p58
    %p65 = scmp.eq.s32.totalorder %s9, 1
    %p66 = por %p64, %p65
    %p67 = scmp.ne.s32.totalorder %s59, %s62
    %p68 = scmp.eq.s32.totalorder %s9, 0
    %p69 = por %p67, %p68
    %p70 = scmp.ne.s32.totalorder %s59, %s62
    %p71 = scmp.eq.s32.totalorder %s14, 1
    %p72 = por %p70, %p71
    %p73 = scmp.ne.s32.totalorder %s62, %s63
    %p74 = scmp.eq.s32.totalorder %s14, 0
    %p75 = por %p73, %p74
    %p76 = scmp.ne.s32.totalorder %s62, %s63
    %p77 = scmp.eq.s32.totalorder %s15, 1
    %p78 = por %p76, %p77
    %p80 = scmp.ne.s32.totalorder %s63, %s79
    %p81 = scmp.eq.s32.totalorder %s15, 0
    %p82 = por %p80, %p81
    %s83 = ssub.s32 %s16, %s28
    %p84 = scmp.eq.s32.totalorder %s83, 0
    %s86 = sadd.s32 %s85, 1
    %s87 = scalar_select %p84, %s85, %s86
    %p90 = pneg %p84
    %p91 = scmp.eq.s32.totalorder %s9, 1
    %p92 = por %p90, %p91
    %p93 = scmp.ne.s32.totalorder %s85, %s88
    %p94 = scmp.eq.s32.totalorder %s9, 0
    %p95 = por %p93, %p94
    %p96 = scmp.ne.s32.totalorder %s85, %s88
    %p97 = scmp.eq.s32.totalorder %s14, 1
    %p98 = por %p96, %p97
    %p99 = scmp.ne.s32.totalorder %s88, %s89
    %p100 = scmp.eq.s32.totalorder %s14, 0
    %p101 = por %p99, %p100
    %p102 = scmp.ne.s32.totalorder %s88, %s89
    %p103 = scmp.eq.s32.totalorder %s15, 1
    %p104 = por %p102, %p103
    %p106 = scmp.ne.s32.totalorder %s89, %s105
    %p107 = scmp.eq.s32.totalorder %s15, 0
    %p108 = por %p106, %p107
    %p109 = scmp.le.s32.totalorder 1, %s9
    %p110 = scmp.lt.s32.totalorder %s9, 3
    %p111 = pnand %p109, %p110
    %p112 = pneg %p111
    // Predicated region
    $region9: #{bn_lrelu_forward.2} parent=5 // pred_check
      _
    $region10: #{bn_lrelu_forward.2} parent=5 // pred_check_branch
      %114 = sbr.rel (%p111) target = $region12
    $region11: #{bn_lrelu_forward.2} parent=5 // pred_region
      %s115 = ssub.s32 %s9, 1
    $region12: #{bn_lrelu_forward.2} parent=5 // pred_fallthru
      _
    %p116 = scmp.lt.s32.totalorder %s9, 2
    // Predicated region
    $region13: #{bn_lrelu_forward.2} parent=5 // pred_check
      %p117 = pneg %p116
    $region14: #{bn_lrelu_forward.2} parent=5 // pred_check_branch
      %119 = sbr.rel (%p117) target = $region16
    $region15: #{bn_lrelu_forward.2} parent=5 // pred_region
      // Predicated region
      $region17: #{bn_lrelu_forward.2} parent=15 // pred_check
        %p120 = pneg %p43
      $region18: #{bn_lrelu_forward.2} parent=15 // pred_check_branch
        %122 = sbr.rel (%p120) target = $region20
      $region19: #{bn_lrelu_forward.2} parent=15 // pred_region
        %s123 = smul.u32 2, %s17
        %p124 = scmp.lt.s32.totalorder %s16, 1
        %s125 = scalar_select %p124, %s16, 1
        %p126 = scmp.lt.s32.totalorder %s123, 1
        %s127 = scalar_select %p126, %s123, 1
        %s128 = smul.addr %s125, 2
        %s129 = sadd.s32 %s127, %s128
        %s130 = smul.addr %s129, 4
        %s131 = scalar_lea.vmem %s0, %s130
        %s132 = smul.u32 2, %s17
      $region20: #{bn_lrelu_forward.2} parent=15 // pred_fallthru
        _
    $region16: #{bn_lrelu_forward.2} parent=5 // pred_fallthru
      _
    %p133 = scmp.le.s32.totalorder 1, %s9
    %p134 = scmp.lt.s32.totalorder %s9, 3
    %p135 = pnand %p133, %p134
    %p136 = pneg %p135
    // Predicated region
    $region21: #{bn_lrelu_forward.2} parent=5 // pred_check
      _
    $region22: #{bn_lrelu_forward.2} parent=5 // pred_check_branch
      %138 = sbr.rel (%p135) target = $region24
    $region23: #{bn_lrelu_forward.2} parent=5 // pred_region
      %s139 = ssub.s32 %s9, 1
      %s140 = smul.u32 2, %s19
      %p141 = scmp.lt.s32.totalorder %s18, 1
      %s142 = scalar_select %p141, %s18, 1
      %p143 = scmp.lt.s32.totalorder %s140, 1
      %s144 = scalar_select %p143, %s140, 1
      %s145 = smul.addr %s142, 2
      %s146 = sadd.s32 %s144, %s145
      %s147 = smul.addr %s146, 4
      %s148 = scalar_lea.vmem %s0, %s147
      %p149 = pneg %p49
      %p150 = pneg %p46
      %p151 = pneg %p75
      %p152 = pneg %p72
      %p153 = scmp.lt.s32.totalorder %s18, 1
      %s154 = scalar_select %p153, %s18, 1
      %s155 = smul.addr %s154, 4
      %s156 = scalar_lea.vmem %s1, %s155
      %p157 = pneg %p101
      %p158 = pneg %p98
      %p159 = scmp.lt.s32.totalorder %s18, 1
      %s160 = scalar_select %p159, %s18, 1
      %s161 = smul.addr %s160, 4
      %s162 = scalar_lea.vmem %s2, %s161
      %s163 = smul.u32 2, %s19
      %p164 = scmp.lt.s32.totalorder %s18, 1
      %s165 = scalar_select %p164, %s18, 1
      %p166 = scmp.lt.s32.totalorder %s163, 1
      %s167 = scalar_select %p166, %s163, 1
      %s168 = smul.addr %s165, 2
      %s169 = sadd.s32 %s167, %s168
      %s170 = smul.addr %s169, 4
      %s171 = scalar_lea.vmem %s0, %s170
      %s172 = smul.u32 2, %s19
      %p173 = scmp.lt.s32.totalorder %s18, 1
      %s174 = scalar_select %p173, %s18, 1
      %s175 = smul.addr %s174, 4
      %s176 = scalar_lea.vmem %s1, %s175
      %p177 = scmp.lt.s32.totalorder %s18, 1
      %s178 = scalar_select %p177, %s18, 1
      %s179 = smul.addr %s178, 4
      %s180 = scalar_lea.vmem %s2, %s179
      %p181 = scmp.eq.s32.totalorder %s19, 0
      // Predicated region
      $region25: #{bn_lrelu_forward.2} parent=23 // pred_check
        %p182 = pneg %p181
      $region26: #{bn_lrelu_forward.2} parent=23 // pred_check_branch
        %184 = sbr.rel (%p182) target = $region28
      $region27: #{bn_lrelu_forward.2} parent=23 // pred_region
        %vm185 = vcmask 3072
        %186 = vst.msk [vmem:[%s176] sm:$0xf] %vm185, 0.0
        %187 = vst.msk [vmem:[%s180] sm:$0xf] %vm185, 0.0
      $region28: #{bn_lrelu_forward.2} parent=23 // pred_fallthru
        _
      %v188 = vld [vmem:[%s171] sm:$0xff]
      %v190 = vcombine.high %v188, %v188
      %vm192 = vcmask 1043456
      %v193 = vsel %vm192, %v188, 0.0
      %v194 = vsel %vm192, %v190, 0.0
      %v195 = vadd.f32 %v193, %v194
      %196 = vadd.xlane.f32.xlu0 %v195
      %v197 = vpop.xlane.xlu0 %196
      %v198 = vmul.f32 %v188, %v188
      %v200 = vcombine.high %v198, %v198
      %v202 = vsel %vm192, %v198, 0.0
      %v203 = vsel %vm192, %v200, 0.0
      %v204 = vadd.f32 %v202, %v203
      %205 = vadd.xlane.f32.xlu0 %v204
      %v206 = vpop.xlane.xlu0 %205
      %v207 = vld [vmem:[%s176] sm:$0xf]
      %v208 = vadd.f32 %v197, 0.0
      %v209 = vadd.f32 %v207, %v208
      %vm210 = vcmask 3072
      %211 = vst.msk [vmem:[%s176] sm:$0xf] %vm210, %v209
      %v212 = vld [vmem:[%s180] sm:$0xf]
      %v213 = vadd.f32 %v206, 0.0
      %v214 = vadd.f32 %v212, %v213
      %215 = vst.msk [vmem:[%s180] sm:$0xf] %vm210, %v214
      %p216 = scmp.lt.s32.totalorder %s18, 1
      %s217 = scalar_select %p216, %s18, 1
      %s218 = smul.addr %s217, 4
      %s219 = scalar_lea.vmem %s1, %s218
      %p220 = scmp.lt.s32.totalorder %s18, 1
      %s221 = scalar_select %p220, %s18, 1
      %s222 = smul.addr %s221, 4
      %s223 = scalar_lea.vmem %s2, %s222
      // Predicated region
      $region29: #{bn_lrelu_forward.2} parent=23 // pred_check
        %p224 = pneg %p72
      $region30: #{bn_lrelu_forward.2} parent=23 // pred_check_branch
        %226 = sbr.rel (%p224) target = $region32
      $region31: #{bn_lrelu_forward.2} parent=23 // pred_region
        _
      $region32: #{bn_lrelu_forward.2} parent=23 // pred_fallthru
        _
      // Predicated region
      $region33: #{bn_lrelu_forward.2} parent=23 // pred_check
        %p227 = pneg %p98
      $region34: #{bn_lrelu_forward.2} parent=23 // pred_check_branch
        %229 = sbr.rel (%p227) target = $region36
      $region35: #{bn_lrelu_forward.2} parent=23 // pred_region
        _
      $region36: #{bn_lrelu_forward.2} parent=23 // pred_fallthru
        _
    $region24: #{bn_lrelu_forward.2} parent=5 // pred_fallthru
      _
    %p230 = scmp.le.s32.totalorder 2, %s9
    // Predicated region
    $region37: #{bn_lrelu_forward.2} parent=5 // pred_check
      %p231 = pneg %p230
    $region38: #{bn_lrelu_forward.2} parent=5 // pred_check_branch
      %233 = sbr.rel (%p231) target = $region40
    $region39: #{bn_lrelu_forward.2} parent=5 // pred_region
      %s234 = ssub.s32 %s9, 2
      // Predicated region
      $region41: #{bn_lrelu_forward.2} parent=39 // pred_check
        %p235 = pneg %p78
      $region42: #{bn_lrelu_forward.2} parent=39 // pred_check_branch
        %237 = sbr.rel (%p235) target = $region44
      $region43: #{bn_lrelu_forward.2} parent=39 // pred_region
        %p238 = scmp.lt.s32.totalorder %s20, 1
        %s239 = scalar_select %p238, %s20, 1
        %s240 = smul.addr %s239, 4
        %s241 = scalar_lea.vmem %s1, %s240
      $region44: #{bn_lrelu_forward.2} parent=39 // pred_fallthru
        _
      // Predicated region
      $region45: #{bn_lrelu_forward.2} parent=39 // pred_check
        %p242 = pneg %p104
      $region46: #{bn_lrelu_forward.2} parent=39 // pred_check_branch
        %244 = sbr.rel (%p242) target = $region48
      $region47: #{bn_lrelu_forward.2} parent=39 // pred_region
        %p245 = scmp.lt.s32.totalorder %s20, 1
        %s246 = scalar_select %p245, %s20, 1
        %s247 = smul.addr %s246, 4
        %s248 = scalar_lea.vmem %s2, %s247
      $region48: #{bn_lrelu_forward.2} parent=39 // pred_fallthru
        _
    $region40: #{bn_lrelu_forward.2} parent=5 // pred_fallthru
      _
  $region6: #{bn_lrelu_forward.2} parent=0 // loop_footer
    %s13 = sadd.s32 1, %s9
  $region7: #{bn_lrelu_forward.2} parent=0 // loop_footer_branch
    %8 = sbr.rel target = $region3
  $region8: #{bn_lrelu_forward.2} parent=0 // loop_exit
    _

// kernel: bn_lrelu_forward.3
$region0: #{bn_lrelu_forward.3}
  #allocation0 [shape = 'u32[]', space=smem, size = 0x4, offset = 0x4, fixed_abs, tag = 'smem constant byte address 0x4 - core index']
  #allocation1 [shape = 'u32[144,128]{1,0:T(1,128)}', space=vmem, size = 0x12000, scoped, tag = 'internal scratch']
  #allocation2 [shape = 'f32[1]{0:T(128)S(6)}', space=smem, size = 0x200, scoped, tag = 'scoped memory for bn_lrelu_forward.3']
  %s0 = inlined_call_operand.vmem [shape: f32[2,4,256], index: 0, kind: input, shape index: {}]
  %s1 = inlined_call_operand.vmem [shape: f32[4,1], index: 1, kind: input, shape index: {}]
  %s2 = inlined_call_operand.vmem [shape: f32[4,1], index: 2, kind: input, shape index: {}]
  %s3 = inlined_call_operand.<no memory space> [shape: f32[1], index: 3, kind: input, shape index: {}]
  %s4 = inlined_call_operand.vmem [shape: f32[2,4,256], index: 4, kind: output, shape index: {}]
  %s5 = sld [smem:[#allocation0]]
  $region49: #{bn_lrelu_forward.3} parent=0
    _
  %s7 = ssub.s32 1, %s5
  %s8 = scalar_select 0, %s7, %s5
  %9 = sst [smem:[#allocation2]] %s3
  loop: start=0, step=1, limit=4
  $region2: #{bn_lrelu_forward.3} parent=0 // loop_pre_header
    _
  $region3: #{bn_lrelu_forward.3} parent=0 // loop_header
    %s11 = sphi 0, %s15
    %p12 = scmp.ge.s32.totalorder %s11, 4
    %s18 = sphi 0, %s30
    %s19 = sphi 0, %s26
    %s20 = sphi 0, %s18
    %s21 = sphi 0, %s19
    %s22 = sphi 0, %s20
    %s23 = sphi 0, %s21
    %s35 = sphi 0, %s37
    %s38 = sphi 0, %s35
    %s39 = sphi 0, %s38
    %s55 = sphi 0, %s39
    %s59 = sphi 0, %s59
    %s61 = sphi 0, %s59
    %s62 = sphi 0, %s61
    %s76 = sphi 0, %s62
    %s80 = sphi 0, %s80
    %s82 = sphi 0, %s80
    %s83 = sphi 0, %s82
    %s97 = sphi 0, %s83
    %s101 = sphi 0, %s101
    %s103 = sphi 0, %s101
    %s104 = sphi 0, %s103
    %s118 = sphi 0, %s104
    %s126 = sphi 0, %s128
    %s129 = sphi 0, %s126
    %s130 = sphi 0, %s129
    %s146 = sphi 0, %s130
  $region4: #{bn_lrelu_forward.3} parent=0 // loop_header_branch
    %14 = sbr.rel (%p12) target = $region8
  $region5: #{bn_lrelu_forward.3} parent=0 // loop_body
    %s16 = ssub.s32 %s11, 1
    %s17 = ssub.s32 %s11, 2
    %s24 = sadd.s32 1, %s19
    %p25 = scmp.ge.s32.totalorder %s24, 1
    %s26 = scalar_select %p25, 0, %s24
    %s27 = sadd.s32 1, %s18
    %s28 = scalar_select %p25, %s27, %s18
    %p29 = scmp.ge.s32.totalorder %s28, 2
    %s30 = scalar_select %p29, 0, %s28
    %s31 = ssub.s32 %s18, %s30
    %s32 = ssub.s32 %s19, %s26
    %s33 = sor.u32 %s31, %s32
    %p34 = scmp.eq.s32.totalorder %s33, 0
    %s36 = sadd.s32 %s35, 1
    %s37 = scalar_select %p34, %s35, %s36
    %p40 = pneg %p34
    %p41 = scmp.eq.s32.totalorder %s11, 1
    %p42 = por %p40, %p41
    %p43 = scmp.ne.s32.totalorder %s35, %s38
    %p44 = scmp.eq.s32.totalorder %s11, 0
    %p45 = por %p43, %p44
    %p46 = scmp.ne.s32.totalorder %s35, %s38
    %p47 = scmp.eq.s32.totalorder %s16, 1
    %p48 = por %p46, %p47
    %p49 = scmp.ne.s32.totalorder %s38, %s39
    %p50 = scmp.eq.s32.totalorder %s16, 0
    %p51 = por %p49, %p50
    %p52 = scmp.ne.s32.totalorder %s38, %s39
    %p53 = scmp.eq.s32.totalorder %s17, 1
    %p54 = por %p52, %p53
    %p56 = scmp.ne.s32.totalorder %s39, %s55
    %p57 = scmp.eq.s32.totalorder %s17, 0
    %p58 = por %p56, %p57
    %s60 = sadd.s32 %s59, 1
    %p63 = scmp.eq.s32.totalorder %s11, 1
    %p64 = scmp.ne.s32.totalorder %s59, %s61
    %p65 = scmp.eq.s32.totalorder %s11, 0
    %p66 = por %p64, %p65
    %p67 = scmp.ne.s32.totalorder %s59, %s61
    %p68 = scmp.eq.s32.totalorder %s16, 1
    %p69 = por %p67, %p68
    %p70 = scmp.ne.s32.totalorder %s61, %s62
    %p71 = scmp.eq.s32.totalorder %s16, 0
    %p72 = por %p70, %p71
    %p73 = scmp.ne.s32.totalorder %s61, %s62
    %p74 = scmp.eq.s32.totalorder %s17, 1
    %p75 = por %p73, %p74
    %p77 = scmp.ne.s32.totalorder %s62, %s76
    %p78 = scmp.eq.s32.totalorder %s17, 0
    %p79 = por %p77, %p78
    %s81 = sadd.s32 %s80, 1
    %p84 = scmp.eq.s32.totalorder %s11, 1
    %p85 = scmp.ne.s32.totalorder %s80, %s82
    %p86 = scmp.eq.s32.totalorder %s11, 0
    %p87 = por %p85, %p86
    %p88 = scmp.ne.s32.totalorder %s80, %s82
    %p89 = scmp.eq.s32.totalorder %s16, 1
    %p90 = por %p88, %p89
    %p91 = scmp.ne.s32.totalorder %s82, %s83
    %p92 = scmp.eq.s32.totalorder %s16, 0
    %p93 = por %p91, %p92
    %p94 = scmp.ne.s32.totalorder %s82, %s83
    %p95 = scmp.eq.s32.totalorder %s17, 1
    %p96 = por %p94, %p95
    %p98 = scmp.ne.s32.totalorder %s83, %s97
    %p99 = scmp.eq.s32.totalorder %s17, 0
    %p100 = por %p98, %p99
    %s102 = sadd.s32 %s101, 1
    %p105 = scmp.eq.s32.totalorder %s11, 1
    %p106 = scmp.ne.s32.totalorder %s101, %s103
    %p107 = scmp.eq.s32.totalorder %s11, 0
    %p108 = por %p106, %p107
    %p109 = scmp.ne.s32.totalorder %s101, %s103
    %p110 = scmp.eq.s32.totalorder %s16, 1
    %p111 = por %p109, %p110
    %p112 = scmp.ne.s32.totalorder %s103, %s104
    %p113 = scmp.eq.s32.totalorder %s16, 0
    %p114 = por %p112, %p113
    %p115 = scmp.ne.s32.totalorder %s103, %s104
    %p116 = scmp.eq.s32.totalorder %s17, 1
    %p117 = por %p115, %p116
    %p119 = scmp.ne.s32.totalorder %s104, %s118
    %p120 = scmp.eq.s32.totalorder %s17, 0
    %p121 = por %p119, %p120
    %s122 = ssub.s32 %s18, %s30
    %s123 = ssub.s32 %s19, %s26
    %s124 = sor.u32 %s122, %s123
    %p125 = scmp.eq.s32.totalorder %s124, 0
    %s127 = sadd.s32 %s126, 1
    %s128 = scalar_select %p125, %s126, %s127
    %p131 = pneg %p125
    %p132 = scmp.eq.s32.totalorder %s11, 1
    %p133 = por %p131, %p132
    %p134 = scmp.ne.s32.totalorder %s126, %s129
    %p135 = scmp.eq.s32.totalorder %s11, 0
    %p136 = por %p134, %p135
    %p137 = scmp.ne.s32.totalorder %s126, %s129
    %p138 = scmp.eq.s32.totalorder %s16, 1
    %p139 = por %p137, %p138
    %p140 = scmp.ne.s32.totalorder %s129, %s130
    %p141 = scmp.eq.s32.totalorder %s16, 0
    %p142 = por %p140, %p141
    %p143 = scmp.ne.s32.totalorder %s129, %s130
    %p144 = scmp.eq.s32.totalorder %s17, 1
    %p145 = por %p143, %p144
    %p147 = scmp.ne.s32.totalorder %s130, %s146
    %p148 = scmp.eq.s32.totalorder %s17, 0
    %p149 = por %p147, %p148
    %p150 = scmp.le.s32.totalorder 1, %s11
    %p151 = scmp.lt.s32.totalorder %s11, 3
    %p152 = pnand %p150, %p151
    %p153 = pneg %p152
    // Predicated region
    $region9: #{bn_lrelu_forward.3} parent=5 // pred_check
      _
    $region10: #{bn_lrelu_forward.3} parent=5 // pred_check_branch
      %155 = sbr.rel (%p152) target = $region12
    $region11: #{bn_lrelu_forward.3} parent=5 // pred_region
      %s156 = ssub.s32 %s11, 1
      // Predicated region
      $region13: #{bn_lrelu_forward.3} parent=11 // pred_check
        %p157 = pneg %p72
      $region14: #{bn_lrelu_forward.3} parent=11 // pred_check_branch
        %159 = sbr.rel (%p157) target = $region16
      $region15: #{bn_lrelu_forward.3} parent=11 // pred_region
        _
      $region16: #{bn_lrelu_forward.3} parent=11 // pred_fallthru
        _
      // Predicated region
      $region17: #{bn_lrelu_forward.3} parent=11 // pred_check
        %p160 = pneg %p93
      $region18: #{bn_lrelu_forward.3} parent=11 // pred_check_branch
        %162 = sbr.rel (%p160) target = $region20
      $region19: #{bn_lrelu_forward.3} parent=11 // pred_region
        _
      $region20: #{bn_lrelu_forward.3} parent=11 // pred_fallthru
        _
      // Predicated region
      $region21: #{bn_lrelu_forward.3} parent=11 // pred_check
        %p163 = pneg %p114
      $region22: #{bn_lrelu_forward.3} parent=11 // pred_check_branch
        %165 = sbr.rel (%p163) target = $region24
      $region23: #{bn_lrelu_forward.3} parent=11 // pred_region
        _
      $region24: #{bn_lrelu_forward.3} parent=11 // pred_fallthru
        _
    $region12: #{bn_lrelu_forward.3} parent=5 // pred_fallthru
      _
    %p166 = scmp.lt.s32.totalorder %s11, 2
    // Predicated region
    $region25: #{bn_lrelu_forward.3} parent=5 // pred_check
      %p167 = pneg %p166
    $region26: #{bn_lrelu_forward.3} parent=5 // pred_check_branch
      %169 = sbr.rel (%p167) target = $region28
    $region27: #{bn_lrelu_forward.3} parent=5 // pred_region
      // Predicated region
      $region29: #{bn_lrelu_forward.3} parent=27 // pred_check
        %p170 = pneg %p45
      $region30: #{bn_lrelu_forward.3} parent=27 // pred_check_branch
        %172 = sbr.rel (%p170) target = $region32
      $region31: #{bn_lrelu_forward.3} parent=27 // pred_region
        %s173 = smul.u32 2, %s19
        %p174 = scmp.lt.s32.totalorder %s18, 1
        %s175 = scalar_select %p174, %s18, 1
        %p176 = scmp.lt.s32.totalorder %s173, 1
        %s177 = scalar_select %p176, %s173, 1
        %s178 = smul.addr %s175, 2
        %s179 = sadd.s32 %s177, %s178
        %s180 = smul.addr %s179, 4
        %s181 = scalar_lea.vmem %s0, %s180
        %s182 = smul.u32 2, %s19
      $region32: #{bn_lrelu_forward.3} parent=27 // pred_fallthru
        _
    $region28: #{bn_lrelu_forward.3} parent=5 // pred_fallthru
      _
    %p183 = scmp.le.s32.totalorder 1, %s11
    %p184 = scmp.lt.s32.totalorder %s11, 3
    %p185 = pnand %p183, %p184
    %p186 = pneg %p185
    // Predicated region
    $region33: #{bn_lrelu_forward.3} parent=5 // pred_check
      _
    $region34: #{bn_lrelu_forward.3} parent=5 // pred_check_branch
      %188 = sbr.rel (%p185) target = $region36
    $region35: #{bn_lrelu_forward.3} parent=5 // pred_region
      %s189 = ssub.s32 %s11, 1
      %s190 = smul.u32 2, %s21
      %p191 = scmp.lt.s32.totalorder %s20, 1
      %s192 = scalar_select %p191, %s20, 1
      %p193 = scmp.lt.s32.totalorder %s190, 1
      %s194 = scalar_select %p193, %s190, 1
      %s195 = smul.addr %s192, 2
      %s196 = sadd.s32 %s194, %s195
      %s197 = smul.addr %s196, 4
      %s198 = scalar_lea.vmem %s0, %s197
      %p199 = pneg %p51
      %p200 = pneg %p48
      %p201 = pneg %p72
      %p202 = pneg %p69
      %p203 = pneg %p93
      %p204 = pneg %p90
      %p205 = pneg %p114
      %p206 = pneg %p111
      %p207 = pneg %p142
      %p208 = pneg %p139
      %s209 = smul.u32 2, %s21
      %p210 = scmp.lt.s32.totalorder %s20, 1
      %s211 = scalar_select %p210, %s20, 1
      %p212 = scmp.lt.s32.totalorder %s209, 1
      %s213 = scalar_select %p212, %s209, 1
      %s214 = smul.addr %s211, 2
      %s215 = sadd.s32 %s213, %s214
      %s216 = smul.addr %s215, 4
      %s217 = scalar_lea.vmem %s4, %s216
      %s218 = smul.u32 2, %s21
      %p219 = scmp.lt.s32.totalorder %s20, 1
      %s220 = scalar_select %p219, %s20, 1
      %p221 = scmp.lt.s32.totalorder %s218, 1
      %s222 = scalar_select %p221, %s218, 1
      %s223 = smul.addr %s220, 2
      %s224 = sadd.s32 %s222, %s223
      %s225 = smul.addr %s224, 4
      %s226 = scalar_lea.vmem %s0, %s225
      %s227 = smul.u32 2, %s21
      %s228 = smul.u32 2, %s21
      %p229 = scmp.lt.s32.totalorder %s20, 1
      %s230 = scalar_select %p229, %s20, 1
      %p231 = scmp.lt.s32.totalorder %s228, 1
      %s232 = scalar_select %p231, %s228, 1
      %s233 = smul.addr %s230, 2
      %s234 = sadd.s32 %s232, %s233
      %s235 = smul.addr %s234, 4
      %s236 = scalar_lea.vmem %s4, %s235
      %s237 = smul.u32 2, %s21
      %v238 = vld [vmem:[%s226] sm:$0xff]
      %v239 = vld [vmem:[%s1] sm:$0xf]
      %v240 = vld [vmem:[%s2] sm:$0xf]
      %242 = vset.pattern.permute.xlu0 0
      %243 = vperm.xlu0 %242, %v239
      %v244 = vpop.permute.xlu0 %243
      %v246 = vunpack.c.l.s4 839922192
      %v247 = vunpack.c.0.s8 %v246
      %v248 = vlaneseq
      %v249 = vshrl.u32 %v248, 7
      %v250 = vsub.s32 %v247, %v249
      %v251 = vrot.slane %v244, %v250
      %v253 = vmul.f32 %v238, %v251
      %255 = vset.pattern.permute.xlu0 0
      %256 = vperm.xlu0 %255, %v240
      %v257 = vpop.permute.xlu0 %256
      %v259 = vunpack.c.l.s4 839922192
      %v260 = vunpack.c.0.s8 %v259
      %v261 = vlaneseq
      %v262 = vshrl.u32 %v261, 7
      %v263 = vsub.s32 %v260, %v262
      %v264 = vrot.slane %v257, %v263
      %v266 = vadd.f32 %v253, %v264
      %s267 = sld [smem:[#allocation2]]
      %vm268 = vcmp.ge.f32.partialorder %v266, 0.0
      %v269 = vstv %s267
      %v270 = vmul.f32 %v266, %v269
      %v271 = vsel %vm268, %v266, %v270
      %272 = vst [vmem:[%s236] sm:$0xff] %v271
      %s273 = smul.u32 2, %s21
      %p274 = scmp.lt.s32.totalorder %s20, 1
      %s275 = scalar_select %p274, %s20, 1
      %p276 = scmp.lt.s32.totalorder %s273, 1
      %s277 = scalar_select %p276, %s273, 1
      %s278 = smul.addr %s275, 2
      %s279 = sadd.s32 %s277, %s278
      %s280 = smul.addr %s279, 4
      %s281 = scalar_lea.vmem %s4, %s280
      // Predicated region
      $region37: #{bn_lrelu_forward.3} parent=35 // pred_check
        %p282 = pneg %p139
      $region38: #{bn_lrelu_forward.3} parent=35 // pred_check_branch
        %284 = sbr.rel (%p282) target = $region40
      $region39: #{bn_lrelu_forward.3} parent=35 // pred_region
        %s285 = smul.u32 2, %s21
      $region40: #{bn_lrelu_forward.3} parent=35 // pred_fallthru
        _
    $region36: #{bn_lrelu_forward.3} parent=5 // pred_fallthru
      _
    %p286 = scmp.le.s32.totalorder 2, %s11
    // Predicated region
    $region41: #{bn_lrelu_forward.3} parent=5 // pred_check
      %p287 = pneg %p286
    $region42: #{bn_lrelu_forward.3} parent=5 // pred_check_branch
      %289 = sbr.rel (%p287) target = $region44
    $region43: #{bn_lrelu_forward.3} parent=5 // pred_region
      %s290 = ssub.s32 %s11, 2
      // Predicated region
      $region45: #{bn_lrelu_forward.3} parent=43 // pred_check
        %p291 = pneg %p145
      $region46: #{bn_lrelu_forward.3} parent=43 // pred_check_branch
        %293 = sbr.rel (%p291) target = $region48
      $region47: #{bn_lrelu_forward.3} parent=43 // pred_region
        %s294 = smul.u32 2, %s23
        %p295 = scmp.lt.s32.totalorder %s22, 1
        %s296 = scalar_select %p295, %s22, 1
        %p297 = scmp.lt.s32.totalorder %s294, 1
        %s298 = scalar_select %p297, %s294, 1
        %s299 = smul.addr %s296, 2
        %s300 = sadd.s32 %s298, %s299
        %s301 = smul.addr %s300, 4
        %s302 = scalar_lea.vmem %s4, %s301
      $region48: #{bn_lrelu_forward.3} parent=43 // pred_fallthru
        _
    $region44: #{bn_lrelu_forward.3} parent=5 // pred_fallthru
      _
  $region6: #{bn_lrelu_forward.3} parent=0 // loop_footer
    %s15 = sadd.s32 1, %s11
  $region7: #{bn_lrelu_forward.3} parent=0 // loop_footer_branch
    %10 = sbr.rel target = $region3
  $region8: #{bn_lrelu_forward.3} parent=0 // loop_exit
    _

</llo_original>
